<compile_context>
chip_gen: v7x
topology: tpu7x:2x2x1
jax: 0.10.0
libtpu: 0.0.40
codegen_flags: <defaults>
</compile_context>

<pallas_src>
import jax
import jax.numpy as jnp
from jax import lax
from jax.experimental import pallas as pl
from jax.experimental.pallas import tpu as pltpu


def _doc_sim_kernel(e1_ref, m1_ref, e2_ref, m2_ref, w_ref, b_ref, out_ref,
                    acc1, cnt1, acc2, cnt2):
    """Masked-sum accumulation over S; Linear + cosine at the last S step.

    e*_ref: (TB, TS, H) bf16 token-embedding tiles for doc1 / doc2
    m*_ref: (TB, TS)    f32  attention-mask tiles
    w_ref : (H, D)      f32  Linear weight (pre-transposed, VMEM-resident)
    b_ref : (1, D)      f32  Linear bias (VMEM-resident)
    out   : (TB, 1)     f32  cosine similarity per pair (written at last S step)
    """
    k = pl.program_id(1)

    @pl.when(k == 0)
    def _init():
        acc1[...] = jnp.zeros_like(acc1)
        acc2[...] = jnp.zeros_like(acc2)
        cnt1[...] = jnp.zeros_like(cnt1)
        cnt2[...] = jnp.zeros_like(cnt2)

    def _accumulate(e_ref, m_ref, acc, cnt):
        e = e_ref[...].astype(jnp.float32)                 # bf16 -> f32 (VPU)
        m = m_ref[...]                                     # (TB, TS)
        acc[...] += jnp.sum(e * m[:, :, None], axis=1)     # (TB, H) masked sum
        cnt[...] += jnp.sum(m, axis=1, keepdims=True)      # (TB, 1) token count

    _accumulate(e1_ref, m1_ref, acc1, cnt1)
    _accumulate(e2_ref, m2_ref, acc2, cnt2)

    @pl.when(k == pl.num_programs(1) - 1)
    def _finalize():
        w = w_ref[...]                                     # (H, D)
        b = b_ref[...]                                     # (1, D)
        # Mean divide deferred past the matmul; reciprocal goes to the EUP.
        inv1 = pl.reciprocal(jnp.maximum(cnt1[...], 1e-9), approx=True)
        inv2 = pl.reciprocal(jnp.maximum(cnt2[...], 1e-9), approx=True)
        y1 = jnp.dot(acc1[...], w, preferred_element_type=jnp.float32) * inv1 + b
        y2 = jnp.dot(acc2[...], w, preferred_element_type=jnp.float32) * inv2 + b
        # torch.cosine_similarity(dim=-1, eps=1e-8):
        #   num / (max(||y1||, eps) * max(||y2||, eps))  ==  num * rsqrt(max(n1sq, eps^2)) * ...
        eps2 = jnp.float32(1e-8) ** 2
        num = jnp.sum(y1 * y2, axis=-1, keepdims=True)     # (TB, 1)
        r1 = lax.rsqrt(jnp.maximum(jnp.sum(y1 * y1, axis=-1, keepdims=True), eps2))
        r2 = lax.rsqrt(jnp.maximum(jnp.sum(y2 * y2, axis=-1, keepdims=True), eps2))
        out_ref[...] = num * r1 * r2


def _pick_tile(full, target, quantum):
    """Largest divisor of `full` that is <= target and a multiple of `quantum`;
    fall back to the full extent (a full-extent block dim is always legal)."""
    if full <= target:
        return full
    t = (min(target, full) // quantum) * quantum
    while t >= quantum:
        if full % t == 0:
            return t
        t -= quantum
    return full


def doc_sim_forward(ids1, mask1, ids2, mask2, embed_table, w, b):
    """Mirrors doc_sim_model.forward(ids1, mask1, ids2, mask2)."""
    # TODO(synk): fuse the embedding gather into the kernel (scalar-prefetched
    # ids + DMA gather into VMEM scratch) to avoid materializing e1/e2 in HBM.
    e1 = embed_table[ids1]                    # (B, S, H) bf16
    e2 = embed_table[ids2]                    # (B, S, H) bf16
    m1 = mask1.astype(jnp.float32)
    m2 = mask2.astype(jnp.float32)

    B, S, H = e1.shape
    D = w.shape[1]

    # Tile sizes: S-tile quantum 128 keeps the mask's lane dim legal, B-tile
    # quantum 8 keeps sublane dims legal; both fall back to full extent at
    # small demo shapes.  Sized so 2 docs x 2 pipeline buffers of (TB,TS,H)
    # bf16 stay far below v7x's 64 MiB VMEM.
    TB = _pick_tile(B, 8, 8)
    TS = _pick_tile(S, 256, 128)
    grid = (B // TB, S // TS)

    e_spec = pl.BlockSpec((TB, TS, H), lambda i, k: (i, k, 0))
    m_spec = pl.BlockSpec((TB, TS), lambda i, k: (i, k))
    w_spec = pl.BlockSpec((H, D), lambda i, k: (0, 0))     # VMEM-resident
    b_spec = pl.BlockSpec((1, D), lambda i, k: (0, 0))     # VMEM-resident

    out = pl.pallas_call(
        _doc_sim_kernel,
        out_shape=jax.ShapeDtypeStruct((B, 1), jnp.float32),
        grid_spec=pltpu.PrefetchScalarGridSpec(
            num_scalar_prefetch=0,
            grid=grid,
            in_specs=[e_spec, m_spec, e_spec, m_spec, w_spec, b_spec],
            out_specs=pl.BlockSpec((TB, 1), lambda i, k: (i, 0)),
            scratch_shapes=[
                pltpu.VMEM((TB, H), jnp.float32),   # acc1: masked sum doc1
                pltpu.VMEM((TB, 1), jnp.float32),   # cnt1: mask count doc1
                pltpu.VMEM((TB, H), jnp.float32),   # acc2
                pltpu.VMEM((TB, 1), jnp.float32),   # cnt2
            ],
        ),
        compiler_params=pltpu.CompilerParams(
            dimension_semantics=("parallel", "arbitrary"),
            vmem_limit_bytes=48 * 1024 * 1024),
    )(e1, m1, e2, m2, w, b.reshape(1, -1))
    return out[:, 0]  # (B,), like torch.cosine_similarity


if __name__ == "__main__":
    B, S, H, D, V = 2, 8, 32, 32, 64  # batch, seq, hidden, proj dim, vocab

    key = jax.random.PRNGKey(0)
    k_ids1, k_ids2, k_tab, k_w, k_b = jax.random.split(key, 5)

    ids1 = jax.random.randint(k_ids1, (B, S), 0, V, dtype=jnp.int32)
    ids2 = jax.random.randint(k_ids2, (B, S), 0, V, dtype=jnp.int32)
    mask1 = jnp.ones((B, S), jnp.float32).at[:, S - 2:].set(0.0)  # pad last 2 tokens
    mask2 = jnp.ones((B, S), jnp.float32)

    # Synthetic deterministic parameters; embedding table stored as bf16.
    embed_table = (0.02 * jax.random.normal(k_tab, (V, H), jnp.float32)).astype(jnp.bfloat16)
    w = jax.random.normal(k_w, (H, D), jnp.float32) / jnp.sqrt(jnp.float32(H))
    b = 0.01 * jax.random.normal(k_b, (D,), jnp.float32)

    out = doc_sim_forward(ids1, mask1, ids2, mask2, embed_table, w, b)
    out = jax.block_until_ready(out)

    # Pure-JAX reference (same bf16 gather path) for a sanity check.
    def _ref_embed(ids, mask):
        e = embed_table[ids].astype(jnp.float32)
        m = mask.astype(jnp.float32)
        pooled = jnp.sum(e * m[:, :, None], axis=1) / jnp.maximum(
            jnp.sum(m, axis=1, keepdims=True), 1e-9)
        return pooled @ w + b

    y1, y2 = _ref_embed(ids1, mask1), _ref_embed(ids2, mask2)
    eps = 1e-8
    ref = jnp.sum(y1 * y2, axis=-1) / (
        jnp.maximum(jnp.linalg.norm(y1, axis=-1), eps)
        * jnp.maximum(jnp.linalg.norm(y2, axis=-1), eps))

    assert out.shape == (B,)
    assert bool(jnp.all(jnp.isfinite(out)))
    assert bool(jnp.allclose(out, ref, rtol=2e-2, atol=2e-2)), (out, ref)
    print("KERNEL_OK")
</pallas_src>

<mosaic_0001>
module attributes {stable_mosaic.version = 11 : i64} {
  func.func @_doc_sim_kernel(%arg0: i32, %arg1: i32, %arg2: memref<2x8x32xbf16, #tpu.memory_space<vmem>>, %arg3: memref<2x8xf32, #tpu.memory_space<vmem>>, %arg4: memref<2x8x32xbf16, #tpu.memory_space<vmem>>, %arg5: memref<2x8xf32, #tpu.memory_space<vmem>>, %arg6: memref<32x32xf32, #tpu.memory_space<vmem>>, %arg7: memref<1x32xf32, #tpu.memory_space<vmem>>, %arg8: memref<2x1xf32, #tpu.memory_space<vmem>>, %arg9: memref<2x32xf32, #tpu.memory_space<vmem>>, %arg10: memref<2x1xf32, #tpu.memory_space<vmem>>, %arg11: memref<2x32xf32, #tpu.memory_space<vmem>>, %arg12: memref<2x1xf32, #tpu.memory_space<vmem>>) attributes {dimension_semantics = [#tpu.dimension_semantics<parallel>, #tpu.dimension_semantics<arbitrary>], iteration_bounds = array<i64: 1, 1>, scalar_prefetch = 0 : i64, scratch_operands = 4 : i64, tpu.core_type = #tpu.core_type<tc>, window_params = [{transform_indices = @transform_0, window_bounds = array<i64: 2, 8, 32>}, {transform_indices = @transform_1, window_bounds = array<i64: 2, 8>}, {transform_indices = @transform_2, window_bounds = array<i64: 2, 8, 32>}, {transform_indices = @transform_3, window_bounds = array<i64: 2, 8>}, {pipeline_mode = #tpu.pipeline_mode<synchronous>, transform_indices = @transform_4, window_bounds = array<i64: 32, 32>}, {pipeline_mode = #tpu.pipeline_mode<synchronous>, transform_indices = @transform_5, window_bounds = array<i64: 1, 32>}, {transform_indices = @transform_6, window_bounds = array<i64: 2, 1>}]} {
    %c0_i32 = arith.constant 0 : i32
    %0 = arith.cmpi eq, %arg1, %c0_i32 : i32
    %1 = arith.extui %0 : i1 to i32
    %c0_i32_0 = arith.constant 0 : i32
    %2 = arith.cmpi ne, %1, %c0_i32_0 : i32
    scf.if %2 {
      %cst_31 = arith.constant 0.000000e+00 : f32
      %36 = vector.broadcast %cst_31 : f32 to vector<2x32xf32>
      %c0_32 = arith.constant 0 : index
      %c0_33 = arith.constant 0 : index
      %37 = vector.load %arg9[%c0_32, %c0_33] : memref<2x32xf32, #tpu.memory_space<vmem>>, vector<2x32xf32>
      tpu.vector_store %arg9[%c0_32, %c0_33], %36 {strides = array<i32>} : memref<2x32xf32, #tpu.memory_space<vmem>>, vector<2x32xf32>,
      %cst_34 = arith.constant 0.000000e+00 : f32
      %38 = vector.broadcast %cst_34 : f32 to vector<2x32xf32>
      %c0_35 = arith.constant 0 : index
      %c0_36 = arith.constant 0 : index
      %39 = vector.load %arg11[%c0_35, %c0_36] : memref<2x32xf32, #tpu.memory_space<vmem>>, vector<2x32xf32>
      tpu.vector_store %arg11[%c0_35, %c0_36], %38 {strides = array<i32>} : memref<2x32xf32, #tpu.memory_space<vmem>>, vector<2x32xf32>,
      %cst_37 = arith.constant 0.000000e+00 : f32
      %40 = vector.broadcast %cst_37 : f32 to vector<2x1xf32>
      %c0_38 = arith.constant 0 : index
      %c0_39 = arith.constant 0 : index
      %41 = vector.load %arg10[%c0_38, %c0_39] : memref<2x1xf32, #tpu.memory_space<vmem>>, vector<2x1xf32>
      tpu.vector_store %arg10[%c0_38, %c0_39], %40 {strides = array<i32>} : memref<2x1xf32, #tpu.memory_space<vmem>>, vector<2x1xf32>,
      %cst_40 = arith.constant 0.000000e+00 : f32
      %42 = vector.broadcast %cst_40 : f32 to vector<2x1xf32>
      %c0_41 = arith.constant 0 : index
      %c0_42 = arith.constant 0 : index
      %43 = vector.load %arg12[%c0_41, %c0_42] : memref<2x1xf32, #tpu.memory_space<vmem>>, vector<2x1xf32>
      tpu.vector_store %arg12[%c0_41, %c0_42], %42 {strides = array<i32>} : memref<2x1xf32, #tpu.memory_space<vmem>>, vector<2x1xf32>,
    } else {
    }
    %c0 = arith.constant 0 : index
    %c0_1 = arith.constant 0 : index
    %c0_2 = arith.constant 0 : index
    %3 = vector.load %arg2[%c0, %c0_1, %c0_2] : memref<2x8x32xbf16, #tpu.memory_space<vmem>>, vector<2x8x32xbf16>
    %4 = arith.extf %3 : vector<2x8x32xbf16> to vector<2x8x32xf32>
    %c0_3 = arith.constant 0 : index
    %c0_4 = arith.constant 0 : index
    %5 = vector.load %arg3[%c0_3, %c0_4] : memref<2x8xf32, #tpu.memory_space<vmem>>, vector<2x8xf32>
    %c0_5 = arith.constant 0 : index
    %c0_6 = arith.constant 0 : index
    %6 = vector.load %arg9[%c0_5, %c0_6] : memref<2x32xf32, #tpu.memory_space<vmem>>, vector<2x32xf32>
    %7 = vector.shape_cast %5 : vector<2x8xf32> to vector<2x8x1xf32>
    %8 = vector.broadcast %7 : vector<2x8x1xf32> to vector<2x8x32xf32>
    %9 = arith.mulf %4, %8 : vector<2x8x32xf32>
    %cst = arith.constant dense<0.000000e+00> : vector<2x32xf32>
    %10 = vector.multi_reduction <add>, %9, %cst [1] : vector<2x8x32xf32> to vector<2x32xf32>
    %11 = arith.addf %6, %10 : vector<2x32xf32>
    %c0_7 = arith.constant 0 : index
    %c0_8 = arith.constant 0 : index
    %12 = vector.load %arg9[%c0_7, %c0_8] : memref<2x32xf32, #tpu.memory_space<vmem>>, vector<2x32xf32>
    tpu.vector_store %arg9[%c0_7, %c0_8], %11 {strides = array<i32>} : memref<2x32xf32, #tpu.memory_space<vmem>>, vector<2x32xf32>,
    %c0_9 = arith.constant 0 : index
    %c0_10 = arith.constant 0 : index
    %13 = vector.load %arg10[%c0_9, %c0_10] : memref<2x1xf32, #tpu.memory_space<vmem>>, vector<2x1xf32>
    %cst_11 = arith.constant dense<0.000000e+00> : vector<2xf32>
    %14 = vector.multi_reduction <add>, %5, %cst_11 [1] : vector<2x8xf32> to vector<2xf32>
    %15 = vector.shape_cast %14 : vector<2xf32> to vector<2x1xf32>
    %16 = arith.addf %13, %15 : vector<2x1xf32>
    %c0_12 = arith.constant 0 : index
    %c0_13 = arith.constant 0 : index
    %17 = vector.load %arg10[%c0_12, %c0_13] : memref<2x1xf32, #tpu.memory_space<vmem>>, vector<2x1xf32>
    tpu.vector_store %arg10[%c0_12, %c0_13], %16 {strides = array<i32>} : memref<2x1xf32, #tpu.memory_space<vmem>>, vector<2x1xf32>,
    %c0_14 = arith.constant 0 : index
    %c0_15 = arith.constant 0 : index
    %c0_16 = arith.constant 0 : index
    %18 = vector.load %arg4[%c0_14, %c0_15, %c0_16] : memref<2x8x32xbf16, #tpu.memory_space<vmem>>, vector<2x8x32xbf16>
    %19 = arith.extf %18 : vector<2x8x32xbf16> to vector<2x8x32xf32>
    %c0_17 = arith.constant 0 : index
    %c0_18 = arith.constant 0 : index
    %20 = vector.load %arg5[%c0_17, %c0_18] : memref<2x8xf32, #tpu.memory_space<vmem>>, vector<2x8xf32>
    %c0_19 = arith.constant 0 : index
    %c0_20 = arith.constant 0 : index
    %21 = vector.load %arg11[%c0_19, %c0_20] : memref<2x32xf32, #tpu.memory_space<vmem>>, vector<2x32xf32>
    %22 = vector.shape_cast %20 : vector<2x8xf32> to vector<2x8x1xf32>
    %23 = vector.broadcast %22 : vector<2x8x1xf32> to vector<2x8x32xf32>
    %24 = arith.mulf %19, %23 : vector<2x8x32xf32>
    %cst_21 = arith.constant dense<0.000000e+00> : vector<2x32xf32>
    %25 = vector.multi_reduction <add>, %24, %cst_21 [1] : vector<2x8x32xf32> to vector<2x32xf32>
    %26 = arith.addf %21, %25 : vector<2x32xf32>
    %c0_22 = arith.constant 0 : index
    %c0_23 = arith.constant 0 : index
    %27 = vector.load %arg11[%c0_22, %c0_23] : memref<2x32xf32, #tpu.memory_space<vmem>>, vector<2x32xf32>
    tpu.vector_store %arg11[%c0_22, %c0_23], %26 {strides = array<i32>} : memref<2x32xf32, #tpu.memory_space<vmem>>, vector<2x32xf32>,
    %c0_24 = arith.constant 0 : index
    %c0_25 = arith.constant 0 : index
    %28 = vector.load %arg12[%c0_24, %c0_25] : memref<2x1xf32, #tpu.memory_space<vmem>>, vector<2x1xf32>
    %cst_26 = arith.constant dense<0.000000e+00> : vector<2xf32>
    %29 = vector.multi_reduction <add>, %20, %cst_26 [1] : vector<2x8xf32> to vector<2xf32>
    %30 = vector.shape_cast %29 : vector<2xf32> to vector<2x1xf32>
    %31 = arith.addf %28, %30 : vector<2x1xf32>
    %c0_27 = arith.constant 0 : index
    %c0_28 = arith.constant 0 : index
    %32 = vector.load %arg12[%c0_27, %c0_28] : memref<2x1xf32, #tpu.memory_space<vmem>>, vector<2x1xf32>
    tpu.vector_store %arg12[%c0_27, %c0_28], %31 {strides = array<i32>} : memref<2x1xf32, #tpu.memory_space<vmem>>, vector<2x1xf32>,
    %c0_i32_29 = arith.constant 0 : i32
    %33 = arith.cmpi eq, %arg1, %c0_i32_29 : i32
    %34 = arith.extui %33 : i1 to i32
    %c0_i32_30 = arith.constant 0 : i32
    %35 = arith.cmpi ne, %34, %c0_i32_30 : i32
    scf.if %35 {
      %c0_31 = arith.constant 0 : index
      %c0_32 = arith.constant 0 : index
      %36 = vector.load %arg6[%c0_31, %c0_32] : memref<32x32xf32, #tpu.memory_space<vmem>>, vector<32x32xf32>
      %c0_33 = arith.constant 0 : index
      %c0_34 = arith.constant 0 : index
      %37 = vector.load %arg7[%c0_33, %c0_34] : memref<1x32xf32, #tpu.memory_space<vmem>>, vector<1x32xf32>
      %c0_35 = arith.constant 0 : index
      %c0_36 = arith.constant 0 : index
      %38 = vector.load %arg10[%c0_35, %c0_36] : memref<2x1xf32, #tpu.memory_space<vmem>>, vector<2x1xf32>
      %cst_37 = arith.constant 9.99999971E-10 : f32
      %39 = vector.broadcast %cst_37 : f32 to vector<2x1xf32>
      %40 = arith.maximumf %38, %39 : vector<2x1xf32>
      %41 = tpu.reciprocal %40 {approx = true} : vector<2x1xf32> -> vector<2x1xf32>
      %c0_38 = arith.constant 0 : index
      %c0_39 = arith.constant 0 : index
      %42 = vector.load %arg12[%c0_38, %c0_39] : memref<2x1xf32, #tpu.memory_space<vmem>>, vector<2x1xf32>
      %cst_40 = arith.constant 9.99999971E-10 : f32
      %43 = vector.broadcast %cst_40 : f32 to vector<2x1xf32>
      %44 = arith.maximumf %42, %43 : vector<2x1xf32>
      %45 = tpu.reciprocal %44 {approx = true} : vector<2x1xf32> -> vector<2x1xf32>
      %c0_41 = arith.constant 0 : index
      %c0_42 = arith.constant 0 : index
      %46 = vector.load %arg9[%c0_41, %c0_42] : memref<2x32xf32, #tpu.memory_space<vmem>>, vector<2x32xf32>
      %cst_43 = arith.constant dense<0.000000e+00> : vector<2x32xf32>
      %47 = tpu.matmul %46, %36, %cst_43 {dimension_numbers = #tpu.dot_dimension_numbers<[1], [0], [0], [1], [0, 0, 1, 1], [], []>} : vector<2x32xf32>, vector<32x32xf32>, vector<2x32xf32> -> vector<2x32xf32>
      %48 = vector.broadcast %41 : vector<2x1xf32> to vector<2x32xf32>
      %49 = arith.mulf %47, %48 : vector<2x32xf32>
      %50 = vector.broadcast %37 : vector<1x32xf32> to vector<2x32xf32>
      %51 = arith.addf %49, %50 : vector<2x32xf32>
      %c0_44 = arith.constant 0 : index
      %c0_45 = arith.constant 0 : index
      %52 = vector.load %arg11[%c0_44, %c0_45] : memref<2x32xf32, #tpu.memory_space<vmem>>, vector<2x32xf32>
      %cst_46 = arith.constant dense<0.000000e+00> : vector<2x32xf32>
      %53 = tpu.matmul %52, %36, %cst_46 {dimension_numbers = #tpu.dot_dimension_numbers<[1], [0], [0], [1], [0, 0, 1, 1], [], []>} : vector<2x32xf32>, vector<32x32xf32>, vector<2x32xf32> -> vector<2x32xf32>
      %54 = vector.broadcast %45 : vector<2x1xf32> to vector<2x32xf32>
      %55 = arith.mulf %53, %54 : vector<2x32xf32>
      %56 = vector.broadcast %37 : vector<1x32xf32> to vector<2x32xf32>
      %57 = arith.addf %55, %56 : vector<2x32xf32>
      %cst_47 = arith.constant 9.99999993E-9 : f32
      %58 = arith.mulf %cst_47, %cst_47 : f32
      %59 = arith.mulf %51, %57 : vector<2x32xf32>
      %cst_48 = arith.constant dense<0.000000e+00> : vector<2xf32>
      %60 = vector.multi_reduction <add>, %59, %cst_48 [1] : vector<2x32xf32> to vector<2xf32>
      %61 = vector.shape_cast %60 : vector<2xf32> to vector<2x1xf32>
      %62 = arith.mulf %51, %51 : vector<2x32xf32>
      %cst_49 = arith.constant dense<0.000000e+00> : vector<2xf32>
      %63 = vector.multi_reduction <add>, %62, %cst_49 [1] : vector<2x32xf32> to vector<2xf32>
      %64 = vector.shape_cast %63 : vector<2xf32> to vector<2x1xf32>
      %65 = vector.broadcast %58 : f32 to vector<2x1xf32>
      %66 = arith.maximumf %64, %65 : vector<2x1xf32>
      %67 = math.rsqrt %66 : vector<2x1xf32>
      %68 = arith.mulf %57, %57 : vector<2x32xf32>
      %cst_50 = arith.constant dense<0.000000e+00> : vector<2xf32>
      %69 = vector.multi_reduction <add>, %68, %cst_50 [1] : vector<2x32xf32> to vector<2xf32>
      %70 = vector.shape_cast %69 : vector<2xf32> to vector<2x1xf32>
      %71 = vector.broadcast %58 : f32 to vector<2x1xf32>
      %72 = arith.maximumf %70, %71 : vector<2x1xf32>
      %73 = math.rsqrt %72 : vector<2x1xf32>
      %74 = arith.mulf %61, %67 : vector<2x1xf32>
      %75 = arith.mulf %74, %73 : vector<2x1xf32>
      %c0_51 = arith.constant 0 : index
      %c0_52 = arith.constant 0 : index
      %76 = vector.load %arg8[%c0_51, %c0_52] : memref<2x1xf32, #tpu.memory_space<vmem>>, vector<2x1xf32>
      tpu.vector_store %arg8[%c0_51, %c0_52], %75 {strides = array<i32>} : memref<2x1xf32, #tpu.memory_space<vmem>>, vector<2x1xf32>,
    } else {
    }
    return
  }
  func.func @transform_0(%arg0: i32, %arg1: i32) -> (i32, i32, i32) {
    %c0_i32 = arith.constant 0 : i32
    %c0_i32_0 = arith.constant 0 : i32
    return %arg0, %arg1, %c0_i32 : i32, i32, i32
  }
  func.func @transform_1(%arg0: i32, %arg1: i32) -> (i32, i32) {
    %c0_i32 = arith.constant 0 : i32
    return %arg0, %arg1 : i32, i32
  }
  func.func @transform_2(%arg0: i32, %arg1: i32) -> (i32, i32, i32) {
    %c0_i32 = arith.constant 0 : i32
    %c0_i32_0 = arith.constant 0 : i32
    return %arg0, %arg1, %c0_i32 : i32, i32, i32
  }
  func.func @transform_3(%arg0: i32, %arg1: i32) -> (i32, i32) {
    %c0_i32 = arith.constant 0 : i32
    return %arg0, %arg1 : i32, i32
  }
  func.func @transform_4(%arg0: i32, %arg1: i32) -> (i32, i32) {
    %c0_i32 = arith.constant 0 : i32
    %c0_i32_0 = arith.constant 0 : i32
    %c0_i32_1 = arith.constant 0 : i32
    return %c0_i32, %c0_i32_0 : i32, i32
  }
  func.func @transform_5(%arg0: i32, %arg1: i32) -> (i32, i32) {
    %c0_i32 = arith.constant 0 : i32
    %c0_i32_0 = arith.constant 0 : i32
    %c0_i32_1 = arith.constant 0 : i32
    return %c0_i32, %c0_i32_0 : i32, i32
  }
  func.func @transform_6(%arg0: i32, %arg1: i32) -> (i32, i32) {
    %c0_i32 = arith.constant 0 : i32
    %c0_i32_0 = arith.constant 0 : i32
    return %arg0, %c0_i32 : i32, i32
  }
}

</mosaic_0001>

<llo_original>
// kernel: tpu_custom_call.1
$region0: #{tpu_custom_call.1}
  #allocation0 [shape = 'u32[]', space=smem, size = 0x4, offset = 0x4, fixed_abs, tag = 'smem constant byte address 0x4 - core index']
  #allocation1 [shape = 'u32[144,128]{1,0:T(1,128)}', space=vmem, size = 0x12000, scoped, tag = 'internal scratch']
  #allocation2 [shape = 'f32[2,32]{1,0:T(2,128)}', space=vmem, size = 0x400, scoped, tag = 'scratch operand']
  #allocation3 [shape = 'f32[2,1]{1,0:T(2,128)}', space=vmem, size = 0x400, scoped, tag = 'scratch operand']
  #allocation4 [shape = 'f32[2,32]{1,0:T(2,128)}', space=vmem, size = 0x400, scoped, tag = 'scratch operand']
  #allocation5 [shape = 'f32[2,1]{1,0:T(2,128)}', space=vmem, size = 0x400, scoped, tag = 'scratch operand']
  %s0 = inlined_call_operand.hbm [shape: bf16[2,8,32], index: 0, kind: input, shape index: {}]
  %s1 = inlined_call_operand.vmem [shape: f32[2,8], index: 1, kind: input, shape index: {}]
  %s2 = inlined_call_operand.hbm [shape: bf16[2,8,32], index: 2, kind: input, shape index: {}]
  %s3 = inlined_call_operand.vmem [shape: f32[2,8], index: 3, kind: input, shape index: {}]
  %s4 = inlined_call_operand.hbm [shape: f32[32,32], index: 4, kind: input, shape index: {}]
  %s5 = inlined_call_operand.vmem [shape: f32[1,32], index: 5, kind: input, shape index: {}]
  %s6 = inlined_call_operand.vmem [shape: f32[2,1], index: 6, kind: output, shape index: {}]
  %s7 = sld [smem:[#allocation0]]
  $region54: #{tpu_custom_call.1} parent=0
    _
  %s9 = ssub.s32 1, %s7
  %s10 = scalar_select 0, %s9, %s7
  $region1: #{tpu_custom_call.1} parent=0
    #allocation6 [shape = 'u8[4096]{0}', space=vmem, size = 0x1000, scoped, tag = 'input window, operand 0, single buffered']
    #allocation7 [shape = 's32[1]{0}', space=sflag, size = 0x4, scoped, tag = 'scoped memory for tpu_custom_call.1']
    #allocation8 [shape = 'u8[4096]{0}', space=vmem, size = 0x1000, scoped, tag = 'input window, operand 2, single buffered']
    #allocation9 [shape = 's32[1]{0}', space=sflag, size = 0x4, scoped, tag = 'scoped memory for tpu_custom_call.1']
    #allocation10 [shape = 'u8[16384]{0}', space=vmem, size = 0x4000, scoped, tag = 'input window, operand 4, single buffered']
    %11 = vsyncpa [#allocation7], 0
    %12 = vsyncpa [#allocation9], 0
    // Predicated region
    $region2: #{tpu_custom_call.1} parent=1 // pred_check
      _
    $region3: #{tpu_custom_call.1} parent=1 // pred_check_branch
      %14 = sbr.rel (0) target = $region5
    $region4: #{tpu_custom_call.1} parent=1 // pred_region
      %s16 = ssub.s32 128, 128
      %17 = vsyncadd [#allocation7], %s16
      %s18 = sshll.u32 [#allocation6], 4
      %s19 = int_to_ptr.vmem [resolvable:$true] %s18
      %24 = dma.hbm_to_vmem [thread:$0]  %s0, 128, %s19, [#allocation7], 64, 64, 4
    $region5: #{tpu_custom_call.1} parent=1 // pred_fallthru
      _
    // Predicated region
    $region6: #{tpu_custom_call.1} parent=1 // pred_check
      _
    $region7: #{tpu_custom_call.1} parent=1 // pred_check_branch
      %26 = sbr.rel (0) target = $region9
    $region8: #{tpu_custom_call.1} parent=1 // pred_region
      _
    $region9: #{tpu_custom_call.1} parent=1 // pred_fallthru
      _
    // Predicated region
    $region10: #{tpu_custom_call.1} parent=1 // pred_check
      _
    $region11: #{tpu_custom_call.1} parent=1 // pred_check_branch
      %28 = sbr.rel (0) target = $region13
    $region12: #{tpu_custom_call.1} parent=1 // pred_region
      %s30 = ssub.s32 128, 128
      %31 = vsyncadd [#allocation9], %s30
      %s32 = sshll.u32 [#allocation8], 4
      %s33 = int_to_ptr.vmem [resolvable:$true] %s32
      %38 = dma.hbm_to_vmem [thread:$0]  %s2, 128, %s33, [#allocation9], 64, 64, 4
    $region13: #{tpu_custom_call.1} parent=1 // pred_fallthru
      _
    // Predicated region
    $region14: #{tpu_custom_call.1} parent=1 // pred_check
      _
    $region15: #{tpu_custom_call.1} parent=1 // pred_check_branch
      %40 = sbr.rel (0) target = $region17
    $region16: #{tpu_custom_call.1} parent=1 // pred_region
      _
    $region17: #{tpu_custom_call.1} parent=1 // pred_fallthru
      _
    // Predicated region
    $region18: #{tpu_custom_call.1} parent=1 // pred_check
      _
    $region19: #{tpu_custom_call.1} parent=1 // pred_check_branch
      %42 = sbr.rel (0) target = $region21
    $region20: #{tpu_custom_call.1} parent=1 // pred_region
      %s44 = ssub.s32 512, 512
      %45 = vsyncadd [#allocation9], %s44
      %s46 = sshll.u32 [#allocation10], 4
      %s47 = int_to_ptr.vmem [resolvable:$true] %s46
      %52 = dma.hbm_to_vmem [thread:$0]  %s4, 512, %s47, [#allocation9], 128, 128, 8
    $region21: #{tpu_custom_call.1} parent=1 // pred_fallthru
      _
    // Predicated region
    $region22: #{tpu_custom_call.1} parent=1 // pred_check
      _
    $region23: #{tpu_custom_call.1} parent=1 // pred_check_branch
      %54 = sbr.rel (0) target = $region25
    $region24: #{tpu_custom_call.1} parent=1 // pred_region
      _
    $region25: #{tpu_custom_call.1} parent=1 // pred_fallthru
      _
    // Predicated region
    $region26: #{tpu_custom_call.1} parent=1 // pred_check
      _
    $region27: #{tpu_custom_call.1} parent=1 // pred_check_branch
      %56 = sbr.rel (0) target = $region29
    $region28: #{tpu_custom_call.1} parent=1 // pred_region
      %57 = dma.done [#allocation7], 128
    $region29: #{tpu_custom_call.1} parent=1 // pred_fallthru
      _
    // Predicated region
    $region30: #{tpu_custom_call.1} parent=1 // pred_check
      _
    $region31: #{tpu_custom_call.1} parent=1 // pred_check_branch
      %59 = sbr.rel (0) target = $region33
    $region32: #{tpu_custom_call.1} parent=1 // pred_region
      %60 = dma.done [#allocation9], 128
    $region33: #{tpu_custom_call.1} parent=1 // pred_fallthru
      _
    // Predicated region
    $region34: #{tpu_custom_call.1} parent=1 // pred_check
      _
    $region35: #{tpu_custom_call.1} parent=1 // pred_check_branch
      %62 = sbr.rel (0) target = $region37
    $region36: #{tpu_custom_call.1} parent=1 // pred_region
      %63 = dma.done [#allocation9], 512
    $region37: #{tpu_custom_call.1} parent=1 // pred_fallthru
      _
    %p64 = scmp.eq.s32.totalorder 0, 0
    // Predicated region
    $region38: #{tpu_custom_call.1} parent=1 // pred_check
      %p65 = pneg %p64
    $region39: #{tpu_custom_call.1} parent=1 // pred_check_branch
      %67 = sbr.rel (%p65) target = $region41
    $region40: #{tpu_custom_call.1} parent=1 // pred_region
      %vm68 = vcmask 254976
      %69 = vst.msk [vmem:[#allocation2] sm:$0x3] %vm68, 0.0
      %70 = vst.msk [vmem:[#allocation4] sm:$0x3] %vm68, 0.0
      %vm71 = vcmask 1024
      %72 = vst.msk [vmem:[#allocation3] sm:$0x3] %vm71, 0.0
      %73 = vst.msk [vmem:[#allocation5] sm:$0x3] %vm71, 0.0
    $region41: #{tpu_custom_call.1} parent=1 // pred_fallthru
      _
    %v74 = vld [vmem:[#allocation6] sm:$0xf]
    %v75 = vld [vmem:[#allocation6 + $0x4] sm:$0xf]
    %v76 = vunpack.c.l.bf16 %v74
    %v77 = vunpack.c.l.bf16 %v75
    %v78 = vld [vmem:[%s1] sm:$0x3]
    %v79 = vld [vmem:[#allocation2] sm:$0x3]
    %v80 = vlaneseq
    %v81 = vshrl.u32 %v80, 7
    %v82 = vsub.s32 0, %v81
    %v83 = vrot.slane %v78, %v82
    %85 = vbcast.lane.b32.xlu0 %v83, 256
    %v86 = vpop.permute.xlu0 %85
    %v87 = vlaneseq
    %v88 = vshrl.u32 %v87, 7
    %v89 = vsub.s32 1, %v88
    %v90 = vrot.slane %v78, %v89
    %92 = vbcast.lane.b32.xlu0 %v90, 256
    %v93 = vpop.permute.xlu0 %92
    %v94 = vmul.f32 %v76, %v86
    %v95 = vmul.f32 %v77, %v93
    %vm96 = vcmask 261120
    %v97 = vsel %vm96, %v94, 0.0
    %v98 = vrot.slane %v97, 4
    %v99 = vadd.f32 %v97, %v98
    %v100 = vrot.slane %v99, 2
    %v101 = vadd.f32 %v99, %v100
    %v102 = vrot.slane %v101, 1
    %v103 = vadd.f32 %v101, %v102
    %v104 = vsel %vm96, %v95, 0.0
    %v105 = vrot.slane %v104, 4
    %v106 = vadd.f32 %v104, %v105
    %v107 = vrot.slane %v106, 2
    %v108 = vadd.f32 %v106, %v107
    %v109 = vrot.slane %v108, 1
    %v110 = vadd.f32 %v108, %v109
    %vm113 = vcmask 1041409
    %v114 = vsel %vm113, %v110, %v103
    %v116 = vadd.f32 %v79, %v114
    %vm117 = vcmask 254976
    %118 = vst.msk [vmem:[#allocation2] sm:$0x3] %vm117, %v116
    %v119 = vld [vmem:[#allocation3] sm:$0x3]
    %vm120 = vcmask 58368
    %v121 = vsel %vm120, %v78, 0.0
    %122 = vadd.xlane.f32.xlu0 %v121
    %v123 = vpop.xlane.xlu0 %122
    %v124 = vadd.f32 %v119, %v123
    %vm125 = vcmask 1024
    %126 = vst.msk [vmem:[#allocation3] sm:$0x3] %vm125, %v124
    %v127 = vld [vmem:[#allocation8] sm:$0xf]
    %v128 = vld [vmem:[#allocation8 + $0x4] sm:$0xf]
    %v129 = vunpack.c.l.bf16 %v127
    %v130 = vunpack.c.l.bf16 %v128
    %v131 = vld [vmem:[%s3] sm:$0x3]
    %v132 = vld [vmem:[#allocation4] sm:$0x3]
    %v133 = vlaneseq
    %v134 = vshrl.u32 %v133, 7
    %v135 = vsub.s32 0, %v134
    %v136 = vrot.slane %v131, %v135
    %138 = vbcast.lane.b32.xlu0 %v136, 256
    %v139 = vpop.permute.xlu0 %138
    %v140 = vlaneseq
    %v141 = vshrl.u32 %v140, 7
    %v142 = vsub.s32 1, %v141
    %v143 = vrot.slane %v131, %v142
    %145 = vbcast.lane.b32.xlu0 %v143, 256
    %v146 = vpop.permute.xlu0 %145
    %v147 = vmul.f32 %v129, %v139
    %v148 = vmul.f32 %v130, %v146
    %v149 = vsel %vm96, %v147, 0.0
    %v150 = vrot.slane %v149, 4
    %v151 = vadd.f32 %v149, %v150
    %v152 = vrot.slane %v151, 2
    %v153 = vadd.f32 %v151, %v152
    %v154 = vrot.slane %v153, 1
    %v155 = vadd.f32 %v153, %v154
    %v156 = vsel %vm96, %v148, 0.0
    %v157 = vrot.slane %v156, 4
    %v158 = vadd.f32 %v156, %v157
    %v159 = vrot.slane %v158, 2
    %v160 = vadd.f32 %v158, %v159
    %v161 = vrot.slane %v160, 1
    %v162 = vadd.f32 %v160, %v161
    %v165 = vsel %vm113, %v162, %v155
    %v167 = vadd.f32 %v132, %v165
    %168 = vst.msk [vmem:[#allocation4] sm:$0x3] %vm117, %v167
    %v169 = vld [vmem:[#allocation5] sm:$0x3]
    %v170 = vsel %vm120, %v131, 0.0
    %171 = vadd.xlane.f32.xlu0 %v170
    %v172 = vpop.xlane.xlu0 %171
    %v173 = vadd.f32 %v169, %v172
    %174 = vst.msk [vmem:[#allocation5] sm:$0x3] %vm125, %v173
    // Predicated region
    $region42: #{tpu_custom_call.1} parent=1 // pred_check
      %p175 = pneg %p64
    $region43: #{tpu_custom_call.1} parent=1 // pred_check_branch
      %177 = sbr.rel (%p175) target = $region45
    $region44: #{tpu_custom_call.1} parent=1 // pred_region
      %v178 = vld [vmem:[#allocation10] sm:$0xff]
      %v179 = vld [vmem:[#allocation10 + $0x8] sm:$0xff]
      %v180 = vld [vmem:[#allocation10 + $0x10] sm:$0xff]
      %v181 = vld [vmem:[#allocation10 + $0x18] sm:$0xff]
      %v182 = vld [vmem:[%s5] sm:$0x1]
      %v183 = vld [vmem:[#allocation3] sm:$0x3]
      %v184 = vmax.f32 %v183, 1e-09
      %v185 = vrcp.pop %v184
      %v186 = vld [vmem:[#allocation5] sm:$0x3]
      %v187 = vmax.f32 %v186, 1e-09
      %v188 = vrcp.pop %v187
      %v189 = vld [vmem:[#allocation2] sm:$0x3]
      %v191 = vsel %vm96, %v189, 0
      %193 = vmatprep.subr.mxu0 0.0
      %194 = vmatpush1.msra.mxu0 %v178
      %195 = vmatprep.subr.mxu0 0.0
      %196 = vmatpush1.msra.mxu0 %v179
      %197 = vmatprep.subr.mxu0 0.0
      %198 = vmatpush1.msra.mxu0 %v180
      %199 = vmatprep.subr.mxu0 0.0
      %200 = vmatpush1.msra.mxu0 %v181
      %201 = vmatprep.subr.mxu0 0.0
      %202 = vmatpush1.msra.mxu0 0.0
      %203 = vmatprep.subr.mxu0 0.0
      %204 = vmatpush1.msra.mxu0 0.0
      %205 = vmatprep.subr.mxu0 0.0
      %206 = vmatpush1.msra.mxu0 0.0
      %207 = vmatprep.subr.mxu0 0.0
      %208 = vmatpush1.msra.mxu0 0.0
      %209 = vmatprep.subr.mxu0 0.0
      %210 = vmatpush1.msra.mxu0 0.0
      %211 = vmatprep.subr.mxu0 0.0
      %212 = vmatpush1.msra.mxu0 0.0
      %213 = vmatprep.subr.mxu0 0.0
      %214 = vmatpush1.msra.mxu0 0.0
      %215 = vmatprep.subr.mxu0 0.0
      %216 = vmatpush1.msra.mxu0 0.0
      %217 = vmatprep.subr.mxu0 0.0
      %218 = vmatpush1.msra.mxu0 0.0
      %219 = vmatprep.subr.mxu0 0.0
      %220 = vmatpush1.msra.mxu0 0.0
      %221 = vmatprep.subr.mxu0 0.0
      %222 = vmatpush1.msra.mxu0 0.0
      %223 = vmatprep.subr.mxu0 0.0
      %224 = vmatpush1.msra.mxu0 0.0
      %225 = vmatprep.subr.mxu0 0.0
      %226 = vmatpush1.msra.mxu0 0.0
      %227 = vmatprep.subr.mxu0 0.0
      %228 = vmatpush1.msra.mxu0 0.0
      %229 = vmatprep.subr.mxu0 0.0
      %230 = vmatpush1.msra.mxu0 0.0
      %231 = vmatprep.subr.mxu0 0.0
      %232 = vmatpush1.msra.mxu0 0.0
      %233 = vmatprep.subr.mxu0 0.0
      %234 = vmatpush1.msra.mxu0 0.0
      %235 = vmatprep.subr.mxu0 0.0
      %236 = vmatpush1.msra.mxu0 0.0
      %237 = vmatprep.subr.mxu0 0.0
      %238 = vmatpush1.msra.mxu0 0.0
      %239 = vmatprep.subr.mxu0 0.0
      %240 = vmatpush1.msra.mxu0 0.0
      %241 = vmatprep.subr.mxu0 0.0
      %242 = vmatpush1.msra.mxu0 0.0
      %243 = vmatprep.subr.mxu0 0.0
      %244 = vmatpush1.msra.mxu0 0.0
      %245 = vmatprep.subr.mxu0 0.0
      %246 = vmatpush1.msra.mxu0 0.0
      %247 = vmatprep.subr.mxu0 0.0
      %248 = vmatpush1.msra.mxu0 0.0
      %249 = vmatprep.subr.mxu0 0.0
      %250 = vmatpush1.msra.mxu0 0.0
      %251 = vmatprep.subr.mxu0 0.0
      %252 = vmatpush1.msra.mxu0 0.0
      %253 = vmatprep.subr.mxu0 0.0
      %254 = vmatpush1.msra.mxu0 0.0
      %255 = vmatprep.subr.mxu0 0.0
      %256 = vmatpush1.msra.mxu0 0.0
      %257 = vmatprep.mubr.f32.mxu0 0.0
      %258 = vmatmul.mubr.f32.gmra.mrb[0].mxu0 %v191
      %v259 = vpop.f32.mrb[0].mxu0
      %v260 = vadd.f32 0.0, %v259
      %v261 = vpop.f32.mrb[0].mxu0
      %262 = vdwg.mxu0
      %264 = vset.pattern.permute.xlu0 0
      %265 = vperm.xlu0 %264, %v185
      %v266 = vpop.permute.xlu0 %265
      %v268 = vmul.f32 %v260, %v266
      %v270 = vlaneseq
      %v271 = vshrl.u32 %v270, 7
      %v272 = vsub.s32 0, %v271
      %v273 = vrot.slane %v182, %v272
      %v275 = vadd.f32 %v268, %v273
      %v276 = vld [vmem:[#allocation4] sm:$0x3]
      %v278 = vsel %vm96, %v276, 0
      %280 = vmatprep.subr.mxu0 0.0
      %281 = vmatpush1.msra.mxu0 %v178
      %282 = vmatprep.subr.mxu0 0.0
      %283 = vmatpush1.msra.mxu0 %v179
      %284 = vmatprep.subr.mxu0 0.0
      %285 = vmatpush1.msra.mxu0 %v180
      %286 = vmatprep.subr.mxu0 0.0
      %287 = vmatpush1.msra.mxu0 %v181
      %288 = vmatprep.subr.mxu0 0.0
      %289 = vmatpush1.msra.mxu0 0.0
      %290 = vmatprep.subr.mxu0 0.0
      %291 = vmatpush1.msra.mxu0 0.0
      %292 = vmatprep.subr.mxu0 0.0
      %293 = vmatpush1.msra.mxu0 0.0
      %294 = vmatprep.subr.mxu0 0.0
      %295 = vmatpush1.msra.mxu0 0.0
      %296 = vmatprep.subr.mxu0 0.0
      %297 = vmatpush1.msra.mxu0 0.0
      %298 = vmatprep.subr.mxu0 0.0
      %299 = vmatpush1.msra.mxu0 0.0
      %300 = vmatprep.subr.mxu0 0.0
      %301 = vmatpush1.msra.mxu0 0.0
      %302 = vmatprep.subr.mxu0 0.0
      %303 = vmatpush1.msra.mxu0 0.0
      %304 = vmatprep.subr.mxu0 0.0
      %305 = vmatpush1.msra.mxu0 0.0
      %306 = vmatprep.subr.mxu0 0.0
      %307 = vmatpush1.msra.mxu0 0.0
      %308 = vmatprep.subr.mxu0 0.0
      %309 = vmatpush1.msra.mxu0 0.0
      %310 = vmatprep.subr.mxu0 0.0
      %311 = vmatpush1.msra.mxu0 0.0
      %312 = vmatprep.subr.mxu0 0.0
      %313 = vmatpush1.msra.mxu0 0.0
      %314 = vmatprep.subr.mxu0 0.0
      %315 = vmatpush1.msra.mxu0 0.0
      %316 = vmatprep.subr.mxu0 0.0
      %317 = vmatpush1.msra.mxu0 0.0
      %318 = vmatprep.subr.mxu0 0.0
      %319 = vmatpush1.msra.mxu0 0.0
      %320 = vmatprep.subr.mxu0 0.0
      %321 = vmatpush1.msra.mxu0 0.0
      %322 = vmatprep.subr.mxu0 0.0
      %323 = vmatpush1.msra.mxu0 0.0
      %324 = vmatprep.subr.mxu0 0.0
      %325 = vmatpush1.msra.mxu0 0.0
      %326 = vmatprep.subr.mxu0 0.0
      %327 = vmatpush1.msra.mxu0 0.0
      %328 = vmatprep.subr.mxu0 0.0
      %329 = vmatpush1.msra.mxu0 0.0
      %330 = vmatprep.subr.mxu0 0.0
      %331 = vmatpush1.msra.mxu0 0.0
      %332 = vmatprep.subr.mxu0 0.0
      %333 = vmatpush1.msra.mxu0 0.0
      %334 = vmatprep.subr.mxu0 0.0
      %335 = vmatpush1.msra.mxu0 0.0
      %336 = vmatprep.subr.mxu0 0.0
      %337 = vmatpush1.msra.mxu0 0.0
      %338 = vmatprep.subr.mxu0 0.0
      %339 = vmatpush1.msra.mxu0 0.0
      %340 = vmatprep.subr.mxu0 0.0
      %341 = vmatpush1.msra.mxu0 0.0
      %342 = vmatprep.subr.mxu0 0.0
      %343 = vmatpush1.msra.mxu0 0.0
      %344 = vmatprep.mubr.f32.mxu0 0.0
      %345 = vmatmul.mubr.f32.gmra.mrb[0].mxu0 %v278
      %v346 = vpop.f32.mrb[0].mxu0
      %v347 = vadd.f32 0.0, %v346
      %v348 = vpop.f32.mrb[0].mxu0
      %349 = vdwg.mxu0
      %351 = vset.pattern.permute.xlu0 0
      %352 = vperm.xlu0 %351, %v188
      %v353 = vpop.permute.xlu0 %352
      %v355 = vmul.f32 %v347, %v353
      %v356 = vadd.f32 %v355, %v273
      %v357 = vmul.f32 %v275, %v356
      %v358 = vsel %vm117, %v357, 0.0
      %359 = vadd.xlane.f32.xlu0 %v358
      %v360 = vpop.xlane.xlu0 %359
      %v361 = vmul.f32 %v275, %v275
      %v362 = vsel %vm117, %v361, 0.0
      %363 = vadd.xlane.f32.xlu0 %v362
      %v364 = vpop.xlane.xlu0 %363
      %v365 = vmax.f32 %v364, 1e-16
      %v366 = vrsqrt.pop %v365
      %v367 = vmul.f32 %v356, %v356
      %v368 = vsel %vm117, %v367, 0.0
      %369 = vadd.xlane.f32.xlu0 %v368
      %v370 = vpop.xlane.xlu0 %369
      %v371 = vmax.f32 %v370, 1e-16
      %v372 = vrsqrt.pop %v371
      %v373 = vmul.f32 %v360, %v366
      %v374 = vmul.f32 %v373, %v372
      %375 = vst.msk [vmem:[%s6] sm:$0x3] %vm125, %v374
    $region45: #{tpu_custom_call.1} parent=1 // pred_fallthru
      _
    // Predicated region
    $region46: #{tpu_custom_call.1} parent=1 // pred_check
      _
    $region47: #{tpu_custom_call.1} parent=1 // pred_check_branch
      %377 = sbr.rel (0) target = $region49
    $region48: #{tpu_custom_call.1} parent=1 // pred_region
      _
    $region49: #{tpu_custom_call.1} parent=1 // pred_fallthru
      _
    // Predicated region
    $region50: #{tpu_custom_call.1} parent=1 // pred_check
      _
    $region51: #{tpu_custom_call.1} parent=1 // pred_check_branch
      %379 = sbr.rel (0) target = $region53
    $region52: #{tpu_custom_call.1} parent=1 // pred_region
      _
    $region53: #{tpu_custom_call.1} parent=1 // pred_fallthru
      _
    %380 = vsyncpa [#allocation7], 1
    %381 = vsyncpa [#allocation9], 1

</llo_original>
